<compile_context>
chip_gen: v7x
topology: tpu7x:2x2x1
jax: 0.10.0
libtpu: 0.0.40
codegen_flags: <defaults>
</compile_context>

<pallas_src>
import functools
import math

import jax
import jax.numpy as jnp
from jax.experimental import pallas as pl
from jax.experimental.pallas import tpu as pltpu


def _round_down(x, m):
    return (x // m) * m


@functools.lru_cache(maxsize=1)
def _vmem_capacity_bytes():
    """Per-core VMEM capacity; fall back to the v7x value (the smallest)."""
    try:
        return int(pltpu.get_tpu_info().vmem_capacity_bytes)
    except Exception:
        return 64 * 1024 * 1024


def _dice_kernel(p_ref, t_ref, o_ref, acc_i_ref, acc_s_ref, *,
                 bn, tile_rows, rows_total, needs_mask, smooth):
    # Grid: axis 0 = batch blocks (parallel), axis 1 = reduction tiles
    # (arbitrary, innermost).  Accumulators persist across the k axis.
    k = pl.program_id(1)
    last = pl.num_programs(1) - 1

    @pl.when(k == 0)
    def _():
        acc_i_ref[...] = jnp.zeros_like(acc_i_ref)
        acc_s_ref[...] = jnp.zeros_like(acc_s_ref)

    p = p_ref[...].astype(jnp.float32)   # (bn, tile_rows, 128)
    t = t_ref[...].astype(jnp.float32)

    def accumulate(pv, tv):
        inter = pv * tv
        both = pv + tv                    # fused sum(pred) + sum(target)
        if tile_rows % 8 == 0:
            # Pure vreg-wise VPU adds into (bn, 8, 128) vector accumulators;
            # the cross-lane/XLU reduce is deferred to the finalize step.
            inter = inter.reshape(bn, tile_rows // 8, 8, 128)
            both = both.reshape(bn, tile_rows // 8, 8, 128)
            acc_i_ref[...] += jnp.sum(inter, axis=1)
            acc_s_ref[...] += jnp.sum(both, axis=1)
        else:
            # Only reachable when the whole row fits in one full-extent tile
            # whose row count is not a multiple of 8 (single reduction step):
            # one sublane reduce into the first accumulator row.
            acc_i_ref[:, 0:1, :] += jnp.sum(inter, axis=1, keepdims=True)
            acc_s_ref[:, 0:1, :] += jnp.sum(both, axis=1, keepdims=True)

    if needs_mask:
        # Steady state: unmasked accumulate (no extra VPU work per element).
        @pl.when(k != last)
        def _():
            accumulate(p, t)

        # Ragged last tile only: mask OOB rows *before* the multiply/adds so
        # undefined block contents cannot leak into the sums.
        @pl.when(k == last)
        def _():
            row = jax.lax.broadcasted_iota(jnp.int32, (bn, tile_rows, 128), 1)
            valid = (k * tile_rows + row) < rows_total
            accumulate(jnp.where(valid, p, 0.0), jnp.where(valid, t, 0.0))
    else:
        accumulate(p, t)

    @pl.when(k == last)
    def _():
        # Single cross-lane reduce + dice formula, once per batch block.
        inter = jnp.sum(jnp.sum(acc_i_ref[...], axis=2, keepdims=True),
                        axis=1, keepdims=True)                    # (bn, 1, 1)
        both = jnp.sum(jnp.sum(acc_s_ref[...], axis=2, keepdims=True),
                       axis=1, keepdims=True)                     # (bn, 1, 1)
        dice = (2.0 * inter + smooth) / (both + smooth)
        o_ref[...] = jnp.broadcast_to(dice, (bn, 1, 128))


@jax.jit
def dice_loss(pred, target):
    assert pred.shape == target.shape
    n = pred.shape[0]
    d = math.prod(pred.shape[1:])

    p = pred.reshape(n, d)
    t = target.reshape(n, d)

    # Lane-align D.  Zeros are sum-neutral; only pays an HBM copy when needed.
    pad = (-d) % 128
    if pad:
        p = jnp.pad(p, ((0, 0), (0, pad)))
        t = jnp.pad(t, ((0, 0), (0, pad)))
    rows_total = (d + pad) // 128

    # Sublane-packed layout: (N, R, 128) — free row-major reshape.
    p = p.reshape(n, rows_total, 128)
    t = t.reshape(n, rows_total, 128)

    # ---- generation-aware tile / VMEM sizing --------------------------------
    # v5e/v6e: 128 MiB VMEM -> 64 MiB limit.  v7x: 64 MiB VMEM -> 48 MiB limit.
    vmem_cap = _vmem_capacity_bytes()
    vmem_limit = min((3 * vmem_cap) // 4, 64 * 1024 * 1024)
    headroom = 8 * 1024 * 1024            # output blocks, accumulators, scratch
    input_budget = max(2 * 1024 * 1024, vmem_limit - headroom)

    # Rows (of 128 lanes, both inputs) resident per step, double-buffered.
    bytes_per_row = 128 * (p.dtype.itemsize + t.dtype.itemsize)
    rows_cap = _round_down(input_budget // (2 * bytes_per_row), 8)
    # Cap at 8192 rows (4 MiB per f32 input per step): ~88% of HBM roofline on
    # v7x, ~94% on v6e, while bounding the unrolled instruction count.
    rows_cap = max(8, min(rows_cap, 8192))

    if rows_total <= rows_cap:
        # Whole row reduces in one step -> batch bn rows per grid step so the
        # per-step DMA stays in the MiB range for small-D / large-N shapes.
        tile_rows = rows_total
        bn = max(1, min(n, rows_cap // max(tile_rows, 1), 256))
        num_k = 1
        needs_mask = False
    else:
        tile_rows = rows_cap              # multiple of 8
        bn = 1
        num_k = pl.cdiv(rows_total, tile_rows)
        needs_mask = (num_k * tile_rows) != rows_total

    num_i = pl.cdiv(n, bn)

    kernel = functools.partial(
        _dice_kernel,
        bn=bn, tile_rows=tile_rows, rows_total=rows_total,
        needs_mask=needs_mask, smooth=1.0)

    out = pl.pallas_call(
        kernel,
        out_shape=jax.ShapeDtypeStruct((n, 1, 128), jnp.float32),
        grid_spec=pltpu.PrefetchScalarGridSpec(
            num_scalar_prefetch=0,
            grid=(num_i, num_k),
            in_specs=[
                pl.BlockSpec((bn, tile_rows, 128), lambda i, k: (i, k, 0)),
                pl.BlockSpec((bn, tile_rows, 128), lambda i, k: (i, k, 0)),
            ],
            out_specs=pl.BlockSpec((bn, 1, 128), lambda i, k: (i, 0, 0)),
            scratch_shapes=[
                pltpu.VMEM((bn, 8, 128), jnp.float32),  # sum(pred * target)
                pltpu.VMEM((bn, 8, 128), jnp.float32),  # sum(pred) + sum(target)
            ],
        ),
        compiler_params=pltpu.CompilerParams(
            dimension_semantics=("parallel", "arbitrary"),
            vmem_limit_bytes=vmem_limit,
        ),
    )(p, t)

    # TODO(synk): for N < num-TensorCores with huge D (v7x megacore), shard the
    # reduction axis across a parallel grid dim and finish the dice formula here.
    dice = out[:, 0, 0]                   # per-row dice score, shape (N,)
    return 1.0 - jnp.sum(dice) / jnp.float32(n)


def dice_loss_ref(pred, target):
    smooth = 1.0
    n = pred.shape[0]
    p = pred.reshape(n, -1).astype(jnp.float32)
    t = target.reshape(n, -1).astype(jnp.float32)
    inter = jnp.sum(p * t, axis=1)
    dice = (2.0 * inter + smooth) / (jnp.sum(p, axis=1) + jnp.sum(t, axis=1) + smooth)
    return 1.0 - jnp.sum(dice) / n


if __name__ == "__main__":
    key = jax.random.PRNGKey(0)
    k1, k2 = jax.random.split(key)

    # pred: sigmoid-like probabilities, target: binary mask. NCHW layout.
    shape = (2, 4, 16, 16)
    pred = jax.nn.sigmoid(jax.random.normal(k1, shape, dtype=jnp.float32))
    target = (jax.random.uniform(k2, shape) > 0.5).astype(jnp.float32)

    loss = dice_loss(pred, target)
    jax.block_until_ready(loss)

    ref = dice_loss_ref(pred, target)
    assert jnp.allclose(loss, ref, rtol=1e-5, atol=1e-5), (loss, ref)

    print("KERNEL_OK")
</pallas_src>

<mosaic_0001>
module attributes {stable_mosaic.version = 11 : i64} {
  func.func @_dice_kernel(%arg0: i32, %arg1: i32, %arg2: memref<2x8x128xf32, #tpu.memory_space<vmem>>, %arg3: memref<2x8x128xf32, #tpu.memory_space<vmem>>, %arg4: memref<2x1x128xf32, #tpu.memory_space<vmem>>, %arg5: memref<2x8x128xf32, #tpu.memory_space<vmem>>, %arg6: memref<2x8x128xf32, #tpu.memory_space<vmem>>) attributes {dimension_semantics = [#tpu.dimension_semantics<parallel>, #tpu.dimension_semantics<arbitrary>], iteration_bounds = array<i64: 1, 1>, scalar_prefetch = 0 : i64, scratch_operands = 2 : i64, tpu.core_type = #tpu.core_type<tc>, window_params = [{transform_indices = @transform_0, window_bounds = array<i64: 2, 8, 128>}, {transform_indices = @transform_1, window_bounds = array<i64: 2, 8, 128>}, {transform_indices = @transform_2, window_bounds = array<i64: 2, 1, 128>}]} {
    %c0_i32 = arith.constant 0 : i32
    %0 = arith.cmpi eq, %arg1, %c0_i32 : i32
    %1 = arith.extui %0 : i1 to i32
    %c0_i32_0 = arith.constant 0 : i32
    %2 = arith.cmpi ne, %1, %c0_i32_0 : i32
    scf.if %2 {
      %cst_21 = arith.constant 0.000000e+00 : f32
      %20 = vector.broadcast %cst_21 : f32 to vector<2x8x128xf32>
      %c0_22 = arith.constant 0 : index
      %c0_23 = arith.constant 0 : index
      %c0_24 = arith.constant 0 : index
      %21 = vector.load %arg5[%c0_22, %c0_23, %c0_24] : memref<2x8x128xf32, #tpu.memory_space<vmem>>, vector<2x8x128xf32>
      tpu.vector_store %arg5[%c0_22, %c0_23, %c0_24], %20 {strides = array<i32>} : memref<2x8x128xf32, #tpu.memory_space<vmem>>, vector<2x8x128xf32>,
      %cst_25 = arith.constant 0.000000e+00 : f32
      %22 = vector.broadcast %cst_25 : f32 to vector<2x8x128xf32>
      %c0_26 = arith.constant 0 : index
      %c0_27 = arith.constant 0 : index
      %c0_28 = arith.constant 0 : index
      %23 = vector.load %arg6[%c0_26, %c0_27, %c0_28] : memref<2x8x128xf32, #tpu.memory_space<vmem>>, vector<2x8x128xf32>
      tpu.vector_store %arg6[%c0_26, %c0_27, %c0_28], %22 {strides = array<i32>} : memref<2x8x128xf32, #tpu.memory_space<vmem>>, vector<2x8x128xf32>,
    } else {
    }
    %c0 = arith.constant 0 : index
    %c0_1 = arith.constant 0 : index
    %c0_2 = arith.constant 0 : index
    %3 = vector.load %arg2[%c0, %c0_1, %c0_2] : memref<2x8x128xf32, #tpu.memory_space<vmem>>, vector<2x8x128xf32>
    %c0_3 = arith.constant 0 : index
    %c0_4 = arith.constant 0 : index
    %c0_5 = arith.constant 0 : index
    %4 = vector.load %arg3[%c0_3, %c0_4, %c0_5] : memref<2x8x128xf32, #tpu.memory_space<vmem>>, vector<2x8x128xf32>
    %5 = arith.mulf %3, %4 : vector<2x8x128xf32>
    %6 = arith.addf %3, %4 : vector<2x8x128xf32>
    %7 = vector.shape_cast %5 : vector<2x8x128xf32> to vector<2x1x8x128xf32>
    %8 = vector.shape_cast %6 : vector<2x8x128xf32> to vector<2x1x8x128xf32>
    %c0_6 = arith.constant 0 : index
    %c0_7 = arith.constant 0 : index
    %c0_8 = arith.constant 0 : index
    %9 = vector.load %arg5[%c0_6, %c0_7, %c0_8] : memref<2x8x128xf32, #tpu.memory_space<vmem>>, vector<2x8x128xf32>
    %cst = arith.constant dense<0.000000e+00> : vector<2x8x128xf32>
    %10 = vector.multi_reduction <add>, %7, %cst [1] : vector<2x1x8x128xf32> to vector<2x8x128xf32>
    %11 = arith.addf %9, %10 : vector<2x8x128xf32>
    %c0_9 = arith.constant 0 : index
    %c0_10 = arith.constant 0 : index
    %c0_11 = arith.constant 0 : index
    %12 = vector.load %arg5[%c0_9, %c0_10, %c0_11] : memref<2x8x128xf32, #tpu.memory_space<vmem>>, vector<2x8x128xf32>
    tpu.vector_store %arg5[%c0_9, %c0_10, %c0_11], %11 {strides = array<i32>} : memref<2x8x128xf32, #tpu.memory_space<vmem>>, vector<2x8x128xf32>,
    %c0_12 = arith.constant 0 : index
    %c0_13 = arith.constant 0 : index
    %c0_14 = arith.constant 0 : index
    %13 = vector.load %arg6[%c0_12, %c0_13, %c0_14] : memref<2x8x128xf32, #tpu.memory_space<vmem>>, vector<2x8x128xf32>
    %cst_15 = arith.constant dense<0.000000e+00> : vector<2x8x128xf32>
    %14 = vector.multi_reduction <add>, %8, %cst_15 [1] : vector<2x1x8x128xf32> to vector<2x8x128xf32>
    %15 = arith.addf %13, %14 : vector<2x8x128xf32>
    %c0_16 = arith.constant 0 : index
    %c0_17 = arith.constant 0 : index
    %c0_18 = arith.constant 0 : index
    %16 = vector.load %arg6[%c0_16, %c0_17, %c0_18] : memref<2x8x128xf32, #tpu.memory_space<vmem>>, vector<2x8x128xf32>
    tpu.vector_store %arg6[%c0_16, %c0_17, %c0_18], %15 {strides = array<i32>} : memref<2x8x128xf32, #tpu.memory_space<vmem>>, vector<2x8x128xf32>,
    %c0_i32_19 = arith.constant 0 : i32
    %17 = arith.cmpi eq, %arg1, %c0_i32_19 : i32
    %18 = arith.extui %17 : i1 to i32
    %c0_i32_20 = arith.constant 0 : i32
    %19 = arith.cmpi ne, %18, %c0_i32_20 : i32
    scf.if %19 {
      %c0_21 = arith.constant 0 : index
      %c0_22 = arith.constant 0 : index
      %c0_23 = arith.constant 0 : index
      %20 = vector.load %arg5[%c0_21, %c0_22, %c0_23] : memref<2x8x128xf32, #tpu.memory_space<vmem>>, vector<2x8x128xf32>
      %cst_24 = arith.constant dense<0.000000e+00> : vector<2x8xf32>
      %21 = vector.multi_reduction <add>, %20, %cst_24 [2] : vector<2x8x128xf32> to vector<2x8xf32>
      %22 = vector.shape_cast %21 : vector<2x8xf32> to vector<2x8x1xf32>
      %cst_25 = arith.constant dense<0.000000e+00> : vector<2x1xf32>
      %23 = vector.multi_reduction <add>, %22, %cst_25 [1] : vector<2x8x1xf32> to vector<2x1xf32>
      %24 = vector.shape_cast %23 : vector<2x1xf32> to vector<2x1x1xf32>
      %c0_26 = arith.constant 0 : index
      %c0_27 = arith.constant 0 : index
      %c0_28 = arith.constant 0 : index
      %25 = vector.load %arg6[%c0_26, %c0_27, %c0_28] : memref<2x8x128xf32, #tpu.memory_space<vmem>>, vector<2x8x128xf32>
      %cst_29 = arith.constant dense<0.000000e+00> : vector<2x8xf32>
      %26 = vector.multi_reduction <add>, %25, %cst_29 [2] : vector<2x8x128xf32> to vector<2x8xf32>
      %27 = vector.shape_cast %26 : vector<2x8xf32> to vector<2x8x1xf32>
      %cst_30 = arith.constant dense<0.000000e+00> : vector<2x1xf32>
      %28 = vector.multi_reduction <add>, %27, %cst_30 [1] : vector<2x8x1xf32> to vector<2x1xf32>
      %29 = vector.shape_cast %28 : vector<2x1xf32> to vector<2x1x1xf32>
      %cst_31 = arith.constant 2.000000e+00 : f32
      %30 = vector.broadcast %cst_31 : f32 to vector<2x1x1xf32>
      %31 = arith.mulf %30, %24 : vector<2x1x1xf32>
      %cst_32 = arith.constant 1.000000e+00 : f32
      %32 = vector.broadcast %cst_32 : f32 to vector<2x1x1xf32>
      %33 = arith.addf %31, %32 : vector<2x1x1xf32>
      %cst_33 = arith.constant 1.000000e+00 : f32
      %34 = vector.broadcast %cst_33 : f32 to vector<2x1x1xf32>
      %35 = arith.addf %29, %34 : vector<2x1x1xf32>
      %36 = arith.divf %33, %35 : vector<2x1x1xf32>
      %37 = vector.shape_cast %36 : vector<2x1x1xf32> to vector<2x1x1xf32>
      %38 = vector.broadcast %37 : vector<2x1x1xf32> to vector<2x1x128xf32>
      %c0_34 = arith.constant 0 : index
      %c0_35 = arith.constant 0 : index
      %c0_36 = arith.constant 0 : index
      %39 = vector.load %arg4[%c0_34, %c0_35, %c0_36] : memref<2x1x128xf32, #tpu.memory_space<vmem>>, vector<2x1x128xf32>
      tpu.vector_store %arg4[%c0_34, %c0_35, %c0_36], %38 {strides = array<i32>} : memref<2x1x128xf32, #tpu.memory_space<vmem>>, vector<2x1x128xf32>,
    } else {
    }
    return
  }
  func.func @transform_0(%arg0: i32, %arg1: i32) -> (i32, i32, i32) {
    %c0_i32 = arith.constant 0 : i32
    %c0_i32_0 = arith.constant 0 : i32
    return %arg0, %arg1, %c0_i32 : i32, i32, i32
  }
  func.func @transform_1(%arg0: i32, %arg1: i32) -> (i32, i32, i32) {
    %c0_i32 = arith.constant 0 : i32
    %c0_i32_0 = arith.constant 0 : i32
    return %arg0, %arg1, %c0_i32 : i32, i32, i32
  }
  func.func @transform_2(%arg0: i32, %arg1: i32) -> (i32, i32, i32) {
    %c0_i32 = arith.constant 0 : i32
    %c0_i32_0 = arith.constant 0 : i32
    %c0_i32_1 = arith.constant 0 : i32
    return %arg0, %c0_i32, %c0_i32_0 : i32, i32, i32
  }
}

</mosaic_0001>

<llo_original>
// kernel: dice_loss.1
$region0: #{dice_loss.1}
  #allocation0 [shape = 'u32[]', space=smem, size = 0x4, offset = 0x4, fixed_abs, tag = 'smem constant byte address 0x4 - core index']
  #allocation1 [shape = 'u32[144,128]{1,0:T(1,128)}', space=vmem, size = 0x12000, scoped, tag = 'internal scratch']
  #allocation2 [shape = 'f32[2,8,128]{2,1,0:T(8,128)}', space=vmem, size = 0x2000, scoped, tag = 'scratch operand']
  #allocation3 [shape = 'f32[2,8,128]{2,1,0:T(8,128)}', space=vmem, size = 0x2000, scoped, tag = 'scratch operand']
  %s0 = inlined_call_operand.vmem [shape: f32[2,8,128], index: 0, kind: input, shape index: {}]
  %s1 = inlined_call_operand.vmem [shape: f32[2,8,128], index: 1, kind: input, shape index: {}]
  %s2 = inlined_call_operand.vmem [shape: f32[2,1,128], index: 2, kind: output, shape index: {}]
  %s3 = sld [smem:[#allocation0]]
  $region26: #{dice_loss.1} parent=0
    _
  %s5 = ssub.s32 1, %s3
  %s6 = scalar_select 0, %s5, %s3
  // Predicated region
  $region2: #{dice_loss.1} parent=0 // pred_check
    _
  $region3: #{dice_loss.1} parent=0 // pred_check_branch
    %8 = sbr.rel (0) target = $region5
  $region4: #{dice_loss.1} parent=0 // pred_region
    _
  $region5: #{dice_loss.1} parent=0 // pred_fallthru
    _
  // Predicated region
  $region6: #{dice_loss.1} parent=0 // pred_check
    _
  $region7: #{dice_loss.1} parent=0 // pred_check_branch
    %10 = sbr.rel (0) target = $region9
  $region8: #{dice_loss.1} parent=0 // pred_region
    _
  $region9: #{dice_loss.1} parent=0 // pred_fallthru
    _
  %p11 = scmp.eq.s32.totalorder 0, 0
  // Predicated region
  $region10: #{dice_loss.1} parent=0 // pred_check
    %p12 = pneg %p11
  $region11: #{dice_loss.1} parent=0 // pred_check_branch
    %14 = sbr.rel (%p12) target = $region13
  $region12: #{dice_loss.1} parent=0 // pred_region
    %15 = vst [vmem:[#allocation2] sm:$0xff] 0.0
    %16 = vst [vmem:[#allocation2 + $0x8] sm:$0xff] 0.0
    %17 = vst [vmem:[#allocation3] sm:$0xff] 0.0
    %18 = vst [vmem:[#allocation3 + $0x8] sm:$0xff] 0.0
  $region13: #{dice_loss.1} parent=0 // pred_fallthru
    _
  %v19 = vld [vmem:[%s0] sm:$0xff]
  %v20 = vld [vmem:[%s0 + $0x8] sm:$0xff]
  %v21 = vld [vmem:[%s1] sm:$0xff]
  %v22 = vld [vmem:[%s1 + $0x8] sm:$0xff]
  %v23 = vmul.f32 %v19, %v21
  %v24 = vmul.f32 %v20, %v22
  %v25 = vadd.f32 %v19, %v21
  %v26 = vadd.f32 %v20, %v22
  %v27 = vld [vmem:[#allocation2] sm:$0xff]
  %v28 = vld [vmem:[#allocation2 + $0x8] sm:$0xff]
  %v29 = vadd.f32 %v23, 0.0
  %v30 = vadd.f32 %v24, 0.0
  %v31 = vadd.f32 %v27, %v29
  %v32 = vadd.f32 %v28, %v30
  %33 = vst [vmem:[#allocation2] sm:$0xff] %v31
  %34 = vst [vmem:[#allocation2 + $0x8] sm:$0xff] %v32
  %v35 = vld [vmem:[#allocation3] sm:$0xff]
  %v36 = vld [vmem:[#allocation3 + $0x8] sm:$0xff]
  %v37 = vadd.f32 %v25, 0.0
  %v38 = vadd.f32 %v26, 0.0
  %v39 = vadd.f32 %v35, %v37
  %v40 = vadd.f32 %v36, %v38
  %41 = vst [vmem:[#allocation3] sm:$0xff] %v39
  %42 = vst [vmem:[#allocation3 + $0x8] sm:$0xff] %v40
  // Predicated region
  $region14: #{dice_loss.1} parent=0 // pred_check
    %p43 = pneg %p11
  $region15: #{dice_loss.1} parent=0 // pred_check_branch
    %45 = sbr.rel (%p43) target = $region17
  $region16: #{dice_loss.1} parent=0 // pred_region
    %v46 = vld [vmem:[#allocation2] sm:$0xff]
    %v47 = vld [vmem:[#allocation2 + $0x8] sm:$0xff]
    %48 = vadd.xlane.f32.xlu0 %v46
    %v49 = vpop.xlane.xlu0 %48
    %50 = vadd.xlane.f32.xlu0 %v47
    %v51 = vpop.xlane.xlu0 %50
    %v52 = vrot.slane %v49, 4
    %v53 = vadd.f32 %v49, %v52
    %v54 = vrot.slane %v53, 2
    %v55 = vadd.f32 %v53, %v54
    %v56 = vrot.slane %v55, 1
    %v57 = vadd.f32 %v55, %v56
    %v58 = vrot.slane %v51, 4
    %v59 = vadd.f32 %v51, %v58
    %v60 = vrot.slane %v59, 2
    %v61 = vadd.f32 %v59, %v60
    %v62 = vrot.slane %v61, 1
    %v63 = vadd.f32 %v61, %v62
    %v64 = vld [vmem:[#allocation3] sm:$0xff]
    %v65 = vld [vmem:[#allocation3 + $0x8] sm:$0xff]
    %66 = vadd.xlane.f32.xlu0 %v64
    %v67 = vpop.xlane.xlu0 %66
    %68 = vadd.xlane.f32.xlu0 %v65
    %v69 = vpop.xlane.xlu0 %68
    %v70 = vrot.slane %v67, 4
    %v71 = vadd.f32 %v67, %v70
    %v72 = vrot.slane %v71, 2
    %v73 = vadd.f32 %v71, %v72
    %v74 = vrot.slane %v73, 1
    %v75 = vadd.f32 %v73, %v74
    %v76 = vrot.slane %v69, 4
    %v77 = vadd.f32 %v69, %v76
    %v78 = vrot.slane %v77, 2
    %v79 = vadd.f32 %v77, %v78
    %v80 = vrot.slane %v79, 1
    %v81 = vadd.f32 %v79, %v80
    %v82 = vmul.f32 %v57, 2.0
    %v83 = vmul.f32 %v63, 2.0
    %v84 = vadd.f32 %v82, 1.0
    %v85 = vadd.f32 %v83, 1.0
    %v86 = vadd.f32 %v75, 1.0
    %v87 = vadd.f32 %v81, 1.0
    %v88 = vrcp.pop %v86
    %v89 = vmul.f32 %v84, %v88
    %v90 = vrcp.pop %v87
    %v91 = vmul.f32 %v85, %v90
    %92 = vst [vmem:[%s2] sm:$0x1] %v89
    %93 = vst [vmem:[%s2 + $0x1] sm:$0x1] %v91
  $region17: #{dice_loss.1} parent=0 // pred_fallthru
    _
  // Predicated region
  $region18: #{dice_loss.1} parent=0 // pred_check
    _
  $region19: #{dice_loss.1} parent=0 // pred_check_branch
    %95 = sbr.rel (0) target = $region21
  $region20: #{dice_loss.1} parent=0 // pred_region
    _
  $region21: #{dice_loss.1} parent=0 // pred_fallthru
    _
  // Predicated region
  $region22: #{dice_loss.1} parent=0 // pred_check
    _
  $region23: #{dice_loss.1} parent=0 // pred_check_branch
    %97 = sbr.rel (0) target = $region25
  $region24: #{dice_loss.1} parent=0 // pred_region
    _
  $region25: #{dice_loss.1} parent=0 // pred_fallthru
    _

</llo_original>
